<compile_context>
chip_gen: v7x
topology: tpu7x:2x2x1
jax: 0.10.0
libtpu: 0.0.40
codegen_flags: <defaults>
</compile_context>

<pallas_src>
import functools

import jax
import jax.numpy as jnp
from jax import lax
from jax.experimental import pallas as pl
from jax.experimental.pallas import tpu as pltpu


def _cross_attention_kernel(node_ref, obs_ref, wq_ref, wk_ref, wv_ref,
                            gamma_ref, beta_ref, out_ref,
                            *, bblk, n, m, e, mm_dtype):
    node = node_ref[...]                      # (Bblk*N, E) f32: residual + LN stay f32
    obs = obs_ref[...]                        # (Bblk*M, O) already mm_dtype

    # Projections with the batch folded into the sublane (row) dimension.
    q = jnp.dot(node.astype(mm_dtype), wq_ref[...],
                preferred_element_type=jnp.float32)                  # (Bblk*N, E)
    k = jnp.dot(obs, wk_ref[...], preferred_element_type=jnp.float32)  # (Bblk*M, E)
    v = jnp.dot(obs, wv_ref[...], preferred_element_type=jnp.float32)  # (Bblk*M, E)

    qb = q.reshape(bblk, n, e)
    kb = k.reshape(bblk, m, e)
    vb = v.reshape(bblk, m, e)

    # Per-batch attention; the reference has no softmax / 1/sqrt(E) scaling.
    # NT contraction via einsum (no explicit transpose -> no XLU relayout).
    attn = jnp.einsum('bne,bme->bnm',
                      qb.astype(mm_dtype), kb.astype(mm_dtype),
                      preferred_element_type=jnp.float32)             # (Bblk, N, M)
    ctx = jnp.einsum('bnm,bme->bne',
                     attn.astype(mm_dtype), vb.astype(mm_dtype),
                     preferred_element_type=jnp.float32)              # (Bblk, N, E)

    new = ctx.reshape(bblk * n, e) + node                             # residual, f32

    # LayerNorm over last dim, eps=1e-6, biased variance (as in PyTorch).
    # var = E[x^2] - mean^2: the two reductions are independent -> overlap on XLUs.
    mean = jnp.mean(new, axis=-1, keepdims=True)
    mean_sq = jnp.mean(new * new, axis=-1, keepdims=True)
    var = mean_sq - mean * mean
    normed = (new - mean) * lax.rsqrt(var + 1e-6)
    out_ref[...] = (normed * gamma_ref[...] + beta_ref[...]).astype(out_ref.dtype)


def cross_attention(node_feature, obs_feature, wq, wk, wv, gamma, beta,
                    *, mm_dtype=jnp.float32):
    """Forward of CrossAttention / TransformerBlock.

    node_feature: (N, E) or (B, N, E); obs_feature: (M, O) or (B, M, O).
    wq: (E, E), wk/wv: (O, E) -- transposed from nn.Linear (y = x @ W).
    gamma/beta: (E,) LayerNorm affine parameters.
    mm_dtype: dtype of MXU operands.  jnp.float32 (default) reproduces the
      PyTorch f32 forward exactly; jnp.bfloat16 is the fast path on v6e/v7x
      (accumulation and LayerNorm remain f32).
    """
    squeeze = node_feature.ndim == 2
    if squeeze:
        node_feature = node_feature[None]
        obs_feature = obs_feature[None]
    B, N, E = node_feature.shape
    _, M, O = obs_feature.shape

    # One fat grid step covering the whole batch, or exactly 2 steps (so v7x's
    # two TensorCores each take half) when the split keeps rows 8-aligned.
    # Never B tiny steps: per-step overhead (~0.35 us) dwarfs per-batch compute.
    grid_steps = 1
    if B % 2 == 0 and ((B // 2) * N) % 8 == 0 and ((B // 2) * M) % 8 == 0:
        grid_steps = 2
    bblk = B // grid_steps

    node2 = node_feature.reshape(B * N, E)                  # batch folded into rows
    obs2 = obs_feature.reshape(B * M, O).astype(mm_dtype)   # obs only feeds matmuls
    wq = wq.astype(mm_dtype)
    wk = wk.astype(mm_dtype)
    wv = wv.astype(mm_dtype)
    gamma2 = gamma.reshape(1, E).astype(jnp.float32)
    beta2 = beta.reshape(1, E).astype(jnp.float32)

    kernel = functools.partial(_cross_attention_kernel,
                               bblk=bblk, n=N, m=M, e=E, mm_dtype=mm_dtype)

    out = pl.pallas_call(
        kernel,
        out_shape=jax.ShapeDtypeStruct((B * N, E), node_feature.dtype),
        grid=(grid_steps,),
        in_specs=[
            pl.BlockSpec((bblk * N, E), lambda b: (b, 0)),   # node rows for this step
            pl.BlockSpec((bblk * M, O), lambda b: (b, 0)),   # obs rows for this step
            pl.BlockSpec((E, E), lambda b: (0, 0)),          # wq (VMEM-resident)
            pl.BlockSpec((O, E), lambda b: (0, 0)),          # wk (VMEM-resident)
            pl.BlockSpec((O, E), lambda b: (0, 0)),          # wv (VMEM-resident)
            pl.BlockSpec((1, E), lambda b: (0, 0)),          # gamma
            pl.BlockSpec((1, E), lambda b: (0, 0)),          # beta
        ],
        out_specs=pl.BlockSpec((bblk * N, E), lambda b: (b, 0)),
        compiler_params=pltpu.CompilerParams(
            dimension_semantics=("parallel",)),              # batch steps independent
    )(node2, obs2, wq, wk, wv, gamma2, beta2)

    out = out.reshape(B, N, E)
    return out[0] if squeeze else out


def init_params(key, in_features_embed, in_features_obs):
    """Deterministic init mirroring PyTorch nn.Linear default (U(-1/sqrt(in), 1/sqrt(in))).
    Weights are returned transposed to (in, out)."""
    kq, kk, kv = jax.random.split(key, 3)
    E, O = in_features_embed, in_features_obs
    bq = 1.0 / jnp.sqrt(E)
    bo = 1.0 / jnp.sqrt(O)
    wq = jax.random.uniform(kq, (E, E), jnp.float32, -bq, bq)   # query_net: Linear(E, E)
    wk = jax.random.uniform(kk, (O, E), jnp.float32, -bo, bo)   # key_net:   Linear(O, E)
    wv = jax.random.uniform(kv, (O, E), jnp.float32, -bo, bo)   # value_net: Linear(O, E)
    gamma = jnp.ones((E,), jnp.float32)                         # LayerNorm weight
    beta = jnp.zeros((E,), jnp.float32)                         # LayerNorm bias
    return wq, wk, wv, gamma, beta


def reference(node_feature, obs_feature, wq, wk, wv, gamma, beta):
    """Pure-JAX reference of the PyTorch forward."""
    obs_key = obs_feature @ wk
    node_query = node_feature @ wq
    obs_value = obs_feature @ wv
    attn = node_query @ obs_key.T
    new = attn @ obs_value + node_feature
    mean = jnp.mean(new, axis=-1, keepdims=True)
    var = jnp.mean((new - mean) ** 2, axis=-1, keepdims=True)
    return (new - mean) / jnp.sqrt(var + 1e-6) * gamma + beta


if __name__ == "__main__":
    key = jax.random.PRNGKey(0)
    k_node, k_obs, k_param, k_bnode, k_bobs = jax.random.split(key, 5)

    in_features_embed = 32   # E
    in_features_obs = 48     # O
    N = 8                    # number of graph nodes
    M = 16                   # number of observation rows
    B = 4                    # batch of independent problems

    wq, wk, wv, gamma, beta = init_params(k_param, in_features_embed, in_features_obs)

    # --- single-problem forward (matches the PyTorch module exactly) ---
    node_feature = jax.random.normal(k_node, (N, in_features_embed), jnp.float32)
    obs_feature = jax.random.normal(k_obs, (M, in_features_obs), jnp.float32)

    out = cross_attention(node_feature, obs_feature, wq, wk, wv, gamma, beta)
    out = jax.block_until_ready(out)

    ref = reference(node_feature, obs_feature, wq, wk, wv, gamma, beta)
    assert out.shape == (N, in_features_embed)
    assert jnp.allclose(out, ref, atol=1e-4, rtol=1e-4), "mismatch vs reference (single)"

    # --- batched forward, f32: B problems in 1-2 fat grid steps ---
    node_b = jax.random.normal(k_bnode, (B, N, in_features_embed), jnp.float32)
    obs_b = jax.random.normal(k_bobs, (B, M, in_features_obs), jnp.float32)

    out_b = cross_attention(node_b, obs_b, wq, wk, wv, gamma, beta)
    out_b = jax.block_until_ready(out_b)

    ref_b = jax.vmap(lambda n_, o_: reference(n_, o_, wq, wk, wv, gamma, beta))(node_b, obs_b)
    assert out_b.shape == (B, N, in_features_embed)
    assert jnp.allclose(out_b, ref_b, atol=1e-4, rtol=1e-4), "mismatch vs reference (batched)"

    # --- batched forward, bf16 MXU operands (v6e/v7x fast path); f32 accumulate/LN ---
    out_bf16 = cross_attention(node_b, obs_b, wq, wk, wv, gamma, beta,
                               mm_dtype=jnp.bfloat16)
    out_bf16 = jax.block_until_ready(out_bf16)
    assert jnp.allclose(out_bf16, ref_b, atol=1e-1, rtol=1e-1), "mismatch vs reference (bf16)"

    print("KERNEL_OK")
</pallas_src>

<mosaic_0001>
module attributes {stable_mosaic.version = 11 : i64} {
  func.func @_cross_attention_kernel(%arg0: i32, %arg1: memref<8x32xf32, #tpu.memory_space<vmem>>, %arg2: memref<16x48xf32, #tpu.memory_space<vmem>>, %arg3: memref<32x32xf32, #tpu.memory_space<vmem>>, %arg4: memref<48x32xf32, #tpu.memory_space<vmem>>, %arg5: memref<48x32xf32, #tpu.memory_space<vmem>>, %arg6: memref<1x32xf32, #tpu.memory_space<vmem>>, %arg7: memref<1x32xf32, #tpu.memory_space<vmem>>, %arg8: memref<8x32xf32, #tpu.memory_space<vmem>>) attributes {dimension_semantics = [#tpu.dimension_semantics<parallel>], iteration_bounds = array<i64: 1>, scalar_prefetch = 0 : i64, scratch_operands = 0 : i64, tpu.core_type = #tpu.core_type<tc>, window_params = [{transform_indices = @transform_0, window_bounds = array<i64: 8, 32>}, {transform_indices = @transform_1, window_bounds = array<i64: 16, 48>}, {pipeline_mode = #tpu.pipeline_mode<synchronous>, transform_indices = @transform_2, window_bounds = array<i64: 32, 32>}, {pipeline_mode = #tpu.pipeline_mode<synchronous>, transform_indices = @transform_3, window_bounds = array<i64: 48, 32>}, {pipeline_mode = #tpu.pipeline_mode<synchronous>, transform_indices = @transform_4, window_bounds = array<i64: 48, 32>}, {pipeline_mode = #tpu.pipeline_mode<synchronous>, transform_indices = @transform_5, window_bounds = array<i64: 1, 32>}, {pipeline_mode = #tpu.pipeline_mode<synchronous>, transform_indices = @transform_6, window_bounds = array<i64: 1, 32>}, {transform_indices = @transform_7, window_bounds = array<i64: 8, 32>}]} {
    %c0 = arith.constant 0 : index
    %c0_0 = arith.constant 0 : index
    %0 = vector.load %arg1[%c0, %c0_0] : memref<8x32xf32, #tpu.memory_space<vmem>>, vector<8x32xf32>
    %c0_1 = arith.constant 0 : index
    %c0_2 = arith.constant 0 : index
    %1 = vector.load %arg2[%c0_1, %c0_2] : memref<16x48xf32, #tpu.memory_space<vmem>>, vector<16x48xf32>
    %c0_3 = arith.constant 0 : index
    %c0_4 = arith.constant 0 : index
    %2 = vector.load %arg3[%c0_3, %c0_4] : memref<32x32xf32, #tpu.memory_space<vmem>>, vector<32x32xf32>
    %cst = arith.constant dense<0.000000e+00> : vector<8x32xf32>
    %3 = tpu.matmul %0, %2, %cst {dimension_numbers = #tpu.dot_dimension_numbers<[1], [0], [0], [1], [0, 0, 1, 1], [], []>} : vector<8x32xf32>, vector<32x32xf32>, vector<8x32xf32> -> vector<8x32xf32>
    %c0_5 = arith.constant 0 : index
    %c0_6 = arith.constant 0 : index
    %4 = vector.load %arg4[%c0_5, %c0_6] : memref<48x32xf32, #tpu.memory_space<vmem>>, vector<48x32xf32>
    %cst_7 = arith.constant dense<0.000000e+00> : vector<16x32xf32>
    %5 = tpu.matmul %1, %4, %cst_7 {dimension_numbers = #tpu.dot_dimension_numbers<[1], [0], [0], [1], [0, 0, 1, 1], [], []>} : vector<16x48xf32>, vector<48x32xf32>, vector<16x32xf32> -> vector<16x32xf32>
    %c0_8 = arith.constant 0 : index
    %c0_9 = arith.constant 0 : index
    %6 = vector.load %arg5[%c0_8, %c0_9] : memref<48x32xf32, #tpu.memory_space<vmem>>, vector<48x32xf32>
    %cst_10 = arith.constant dense<0.000000e+00> : vector<16x32xf32>
    %7 = tpu.matmul %1, %6, %cst_10 {dimension_numbers = #tpu.dot_dimension_numbers<[1], [0], [0], [1], [0, 0, 1, 1], [], []>} : vector<16x48xf32>, vector<48x32xf32>, vector<16x32xf32> -> vector<16x32xf32>
    %8 = vector.shape_cast %3 : vector<8x32xf32> to vector<1x8x32xf32>
    %9 = vector.shape_cast %5 : vector<16x32xf32> to vector<1x16x32xf32>
    %10 = vector.shape_cast %7 : vector<16x32xf32> to vector<1x16x32xf32>
    "tpu.trace_start"() <{level = 10 : i32, message = "bne,bme->bnm"}> : () -> ()
    %cst_11 = arith.constant dense<0.000000e+00> : vector<1x8x16xf32>
    %11 = tpu.matmul %8, %9, %cst_11 {dimension_numbers = #tpu.dot_dimension_numbers<[2], [2], [1], [1], [0, 0, 0, 1, 1, 1], [0], [0]>} : vector<1x8x32xf32>, vector<1x16x32xf32>, vector<1x8x16xf32> -> vector<1x8x16xf32>
    "tpu.trace_stop"() : () -> ()
    "tpu.trace_start"() <{level = 10 : i32, message = "bnm,bme->bne"}> : () -> ()
    %cst_12 = arith.constant dense<0.000000e+00> : vector<1x8x32xf32>
    %12 = tpu.matmul %11, %10, %cst_12 {dimension_numbers = #tpu.dot_dimension_numbers<[2], [1], [1], [2], [0, 0, 0, 1, 1, 2], [0], [0]>} : vector<1x8x16xf32>, vector<1x16x32xf32>, vector<1x8x32xf32> -> vector<1x8x32xf32>
    "tpu.trace_stop"() : () -> ()
    %13 = vector.shape_cast %12 : vector<1x8x32xf32> to vector<8x32xf32>
    %14 = arith.addf %13, %0 : vector<8x32xf32>
    %cst_13 = arith.constant dense<0.000000e+00> : vector<8xf32>
    %15 = vector.multi_reduction <add>, %14, %cst_13 [1] : vector<8x32xf32> to vector<8xf32>
    %16 = vector.shape_cast %15 : vector<8xf32> to vector<8x1xf32>
    %cst_14 = arith.constant 3.200000e+01 : f32
    %17 = vector.broadcast %cst_14 : f32 to vector<8x1xf32>
    %18 = arith.divf %16, %17 : vector<8x1xf32>
    %19 = arith.mulf %14, %14 : vector<8x32xf32>
    %cst_15 = arith.constant dense<0.000000e+00> : vector<8xf32>
    %20 = vector.multi_reduction <add>, %19, %cst_15 [1] : vector<8x32xf32> to vector<8xf32>
    %21 = vector.shape_cast %20 : vector<8xf32> to vector<8x1xf32>
    %cst_16 = arith.constant 3.200000e+01 : f32
    %22 = vector.broadcast %cst_16 : f32 to vector<8x1xf32>
    %23 = arith.divf %21, %22 : vector<8x1xf32>
    %24 = arith.mulf %18, %18 : vector<8x1xf32>
    %25 = arith.subf %23, %24 : vector<8x1xf32>
    %26 = vector.broadcast %18 : vector<8x1xf32> to vector<8x32xf32>
    %27 = arith.subf %14, %26 : vector<8x32xf32>
    %cst_17 = arith.constant 9.99999997E-7 : f32
    %28 = vector.broadcast %cst_17 : f32 to vector<8x1xf32>
    %29 = arith.addf %25, %28 : vector<8x1xf32>
    %30 = math.rsqrt %29 : vector<8x1xf32>
    %31 = vector.broadcast %30 : vector<8x1xf32> to vector<8x32xf32>
    %32 = arith.mulf %27, %31 : vector<8x32xf32>
    %c0_18 = arith.constant 0 : index
    %c0_19 = arith.constant 0 : index
    %33 = vector.load %arg6[%c0_18, %c0_19] : memref<1x32xf32, #tpu.memory_space<vmem>>, vector<1x32xf32>
    %34 = vector.broadcast %33 : vector<1x32xf32> to vector<8x32xf32>
    %35 = arith.mulf %32, %34 : vector<8x32xf32>
    %c0_20 = arith.constant 0 : index
    %c0_21 = arith.constant 0 : index
    %36 = vector.load %arg7[%c0_20, %c0_21] : memref<1x32xf32, #tpu.memory_space<vmem>>, vector<1x32xf32>
    %37 = vector.broadcast %36 : vector<1x32xf32> to vector<8x32xf32>
    %38 = arith.addf %35, %37 : vector<8x32xf32>
    %c0_22 = arith.constant 0 : index
    %c0_23 = arith.constant 0 : index
    %39 = vector.load %arg8[%c0_22, %c0_23] : memref<8x32xf32, #tpu.memory_space<vmem>>, vector<8x32xf32>
    tpu.vector_store %arg8[%c0_22, %c0_23], %38 {strides = array<i32>} : memref<8x32xf32, #tpu.memory_space<vmem>>, vector<8x32xf32>,
    return
  }
  func.func @transform_0(%arg0: i32) -> (i32, i32) {
    %c0_i32 = arith.constant 0 : i32
    %c0_i32_0 = arith.constant 0 : i32
    return %arg0, %c0_i32 : i32, i32
  }
  func.func @transform_1(%arg0: i32) -> (i32, i32) {
    %c0_i32 = arith.constant 0 : i32
    %c0_i32_0 = arith.constant 0 : i32
    return %arg0, %c0_i32 : i32, i32
  }
  func.func @transform_2(%arg0: i32) -> (i32, i32) {
    %c0_i32 = arith.constant 0 : i32
    %c0_i32_0 = arith.constant 0 : i32
    %c0_i32_1 = arith.constant 0 : i32
    return %c0_i32, %c0_i32_0 : i32, i32
  }
  func.func @transform_3(%arg0: i32) -> (i32, i32) {
    %c0_i32 = arith.constant 0 : i32
    %c0_i32_0 = arith.constant 0 : i32
    %c0_i32_1 = arith.constant 0 : i32
    return %c0_i32, %c0_i32_0 : i32, i32
  }
  func.func @transform_4(%arg0: i32) -> (i32, i32) {
    %c0_i32 = arith.constant 0 : i32
    %c0_i32_0 = arith.constant 0 : i32
    %c0_i32_1 = arith.constant 0 : i32
    return %c0_i32, %c0_i32_0 : i32, i32
  }
  func.func @transform_5(%arg0: i32) -> (i32, i32) {
    %c0_i32 = arith.constant 0 : i32
    %c0_i32_0 = arith.constant 0 : i32
    %c0_i32_1 = arith.constant 0 : i32
    return %c0_i32, %c0_i32_0 : i32, i32
  }
  func.func @transform_6(%arg0: i32) -> (i32, i32) {
    %c0_i32 = arith.constant 0 : i32
    %c0_i32_0 = arith.constant 0 : i32
    %c0_i32_1 = arith.constant 0 : i32
    return %c0_i32, %c0_i32_0 : i32, i32
  }
  func.func @transform_7(%arg0: i32) -> (i32, i32) {
    %c0_i32 = arith.constant 0 : i32
    %c0_i32_0 = arith.constant 0 : i32
    return %arg0, %c0_i32 : i32, i32
  }
}

</mosaic_0001>

<llo_original>
// kernel: tpu_custom_call.1
$region0: #{tpu_custom_call.1}
  #allocation0 [shape = 'u32[]', space=smem, size = 0x4, offset = 0x4, fixed_abs, tag = 'smem constant byte address 0x4 - core index']
  #allocation1 [shape = 'u32[144,128]{1,0:T(1,128)}', space=vmem, size = 0x12000, scoped, tag = 'internal scratch']
  %s0 = inlined_call_operand.vmem [shape: f32[8,32], index: 0, kind: input, shape index: {}]
  %s1 = inlined_call_operand.vmem [shape: f32[16,48], index: 1, kind: input, shape index: {}]
  %s2 = inlined_call_operand.vmem [shape: f32[32,32], index: 2, kind: input, shape index: {}]
  %s3 = inlined_call_operand.vmem [shape: f32[48,32], index: 3, kind: input, shape index: {}]
  %s4 = inlined_call_operand.vmem [shape: f32[48,32], index: 4, kind: input, shape index: {}]
  %s5 = inlined_call_operand.vmem [shape: f32[1,32], index: 5, kind: input, shape index: {}]
  %s6 = inlined_call_operand.vmem [shape: f32[1,32], index: 6, kind: input, shape index: {}]
  %s7 = inlined_call_operand.hbm [shape: f32[8,32], index: 7, kind: output, shape index: {}]
  %s8 = sld [smem:[#allocation0]]
  $region38: #{tpu_custom_call.1} parent=0
    _
  %s10 = ssub.s32 1, %s8
  %s11 = scalar_select 0, %s10, %s8
  $region1: #{tpu_custom_call.1} parent=0
    #allocation2 [shape = 'u8[4096]{0}', space=vmem, size = 0x1000, scoped, tag = 'output window, operand 0, single buffered']
    #allocation3 [shape = 's32[1]{0}', space=sflag, size = 0x4, scoped, tag = 'scoped memory for tpu_custom_call.1']
    %12 = vsyncpa [#allocation3], 0
    // Predicated region
    $region2: #{tpu_custom_call.1} parent=1 // pred_check
      _
    $region3: #{tpu_custom_call.1} parent=1 // pred_check_branch
      %14 = sbr.rel (0) target = $region5
    $region4: #{tpu_custom_call.1} parent=1 // pred_region
      _
    $region5: #{tpu_custom_call.1} parent=1 // pred_fallthru
      _
    // Predicated region
    $region6: #{tpu_custom_call.1} parent=1 // pred_check
      _
    $region7: #{tpu_custom_call.1} parent=1 // pred_check_branch
      %16 = sbr.rel (0) target = $region9
    $region8: #{tpu_custom_call.1} parent=1 // pred_region
      _
    $region9: #{tpu_custom_call.1} parent=1 // pred_fallthru
      _
    // Predicated region
    $region10: #{tpu_custom_call.1} parent=1 // pred_check
      _
    $region11: #{tpu_custom_call.1} parent=1 // pred_check_branch
      %18 = sbr.rel (0) target = $region13
    $region12: #{tpu_custom_call.1} parent=1 // pred_region
      _
    $region13: #{tpu_custom_call.1} parent=1 // pred_fallthru
      _
    // Predicated region
    $region14: #{tpu_custom_call.1} parent=1 // pred_check
      _
    $region15: #{tpu_custom_call.1} parent=1 // pred_check_branch
      %20 = sbr.rel (0) target = $region17
    $region16: #{tpu_custom_call.1} parent=1 // pred_region
      _
    $region17: #{tpu_custom_call.1} parent=1 // pred_fallthru
      _
    // Predicated region
    $region18: #{tpu_custom_call.1} parent=1 // pred_check
      _
    $region19: #{tpu_custom_call.1} parent=1 // pred_check_branch
      %22 = sbr.rel (0) target = $region21
    $region20: #{tpu_custom_call.1} parent=1 // pred_region
      _
    $region21: #{tpu_custom_call.1} parent=1 // pred_fallthru
      _
    // Predicated region
    $region22: #{tpu_custom_call.1} parent=1 // pred_check
      _
    $region23: #{tpu_custom_call.1} parent=1 // pred_check_branch
      %24 = sbr.rel (0) target = $region25
    $region24: #{tpu_custom_call.1} parent=1 // pred_region
      _
    $region25: #{tpu_custom_call.1} parent=1 // pred_fallthru
      _
    // Predicated region
    $region26: #{tpu_custom_call.1} parent=1 // pred_check
      _
    $region27: #{tpu_custom_call.1} parent=1 // pred_check_branch
      %26 = sbr.rel (0) target = $region29
    $region28: #{tpu_custom_call.1} parent=1 // pred_region
      _
    $region29: #{tpu_custom_call.1} parent=1 // pred_fallthru
      _
    %v27 = vld [vmem:[%s0] sm:$0xff]
    %v28 = vld [vmem:[%s1] sm:$0xff]
    %v29 = vld [vmem:[%s1 + $0x8] sm:$0xff]
    %v30 = vld [vmem:[%s2] sm:$0xff]
    %v31 = vld [vmem:[%s2 + $0x8] sm:$0xff]
    %v32 = vld [vmem:[%s2 + $0x10] sm:$0xff]
    %v33 = vld [vmem:[%s2 + $0x18] sm:$0xff]
    %vm34 = vcmask 261120
    %v36 = vsel %vm34, %v27, 0
    %38 = vmatprep.subr.mxu0 0.0
    %39 = vmatpush1.msra.mxu0 %v30
    %40 = vmatprep.subr.mxu0 0.0
    %41 = vmatpush1.msra.mxu0 %v31
    %42 = vmatprep.subr.mxu0 0.0
    %43 = vmatpush1.msra.mxu0 %v32
    %44 = vmatprep.subr.mxu0 0.0
    %45 = vmatpush1.msra.mxu0 %v33
    %46 = vmatprep.subr.mxu0 0.0
    %47 = vmatpush1.msra.mxu0 0.0
    %48 = vmatprep.subr.mxu0 0.0
    %49 = vmatpush1.msra.mxu0 0.0
    %50 = vmatprep.subr.mxu0 0.0
    %51 = vmatpush1.msra.mxu0 0.0
    %52 = vmatprep.subr.mxu0 0.0
    %53 = vmatpush1.msra.mxu0 0.0
    %54 = vmatprep.subr.mxu0 0.0
    %55 = vmatpush1.msra.mxu0 0.0
    %56 = vmatprep.subr.mxu0 0.0
    %57 = vmatpush1.msra.mxu0 0.0
    %58 = vmatprep.subr.mxu0 0.0
    %59 = vmatpush1.msra.mxu0 0.0
    %60 = vmatprep.subr.mxu0 0.0
    %61 = vmatpush1.msra.mxu0 0.0
    %62 = vmatprep.subr.mxu0 0.0
    %63 = vmatpush1.msra.mxu0 0.0
    %64 = vmatprep.subr.mxu0 0.0
    %65 = vmatpush1.msra.mxu0 0.0
    %66 = vmatprep.subr.mxu0 0.0
    %67 = vmatpush1.msra.mxu0 0.0
    %68 = vmatprep.subr.mxu0 0.0
    %69 = vmatpush1.msra.mxu0 0.0
    %70 = vmatprep.subr.mxu0 0.0
    %71 = vmatpush1.msra.mxu0 0.0
    %72 = vmatprep.subr.mxu0 0.0
    %73 = vmatpush1.msra.mxu0 0.0
    %74 = vmatprep.subr.mxu0 0.0
    %75 = vmatpush1.msra.mxu0 0.0
    %76 = vmatprep.subr.mxu0 0.0
    %77 = vmatpush1.msra.mxu0 0.0
    %78 = vmatprep.subr.mxu0 0.0
    %79 = vmatpush1.msra.mxu0 0.0
    %80 = vmatprep.subr.mxu0 0.0
    %81 = vmatpush1.msra.mxu0 0.0
    %82 = vmatprep.subr.mxu0 0.0
    %83 = vmatpush1.msra.mxu0 0.0
    %84 = vmatprep.subr.mxu0 0.0
    %85 = vmatpush1.msra.mxu0 0.0
    %86 = vmatprep.subr.mxu0 0.0
    %87 = vmatpush1.msra.mxu0 0.0
    %88 = vmatprep.subr.mxu0 0.0
    %89 = vmatpush1.msra.mxu0 0.0
    %90 = vmatprep.subr.mxu0 0.0
    %91 = vmatpush1.msra.mxu0 0.0
    %92 = vmatprep.subr.mxu0 0.0
    %93 = vmatpush1.msra.mxu0 0.0
    %94 = vmatprep.subr.mxu0 0.0
    %95 = vmatpush1.msra.mxu0 0.0
    %96 = vmatprep.subr.mxu0 0.0
    %97 = vmatpush1.msra.mxu0 0.0
    %98 = vmatprep.subr.mxu0 0.0
    %99 = vmatpush1.msra.mxu0 0.0
    %100 = vmatprep.subr.mxu0 0.0
    %101 = vmatpush1.msra.mxu0 0.0
    %102 = vmatprep.mubr.f32.mxu0 0.0
    %103 = vmatmul.mubr.f32.gmra.mrb[0].mxu0 %v36
    %v104 = vpop.f32.mrb[0].mxu0
    %v105 = vadd.f32 0.0, %v104
    %v106 = vpop.f32.mrb[0].mxu0
    %107 = vdwg.mxu0
    %v108 = vld [vmem:[%s3] sm:$0xff]
    %v109 = vld [vmem:[%s3 + $0x8] sm:$0xff]
    %v110 = vld [vmem:[%s3 + $0x10] sm:$0xff]
    %v111 = vld [vmem:[%s3 + $0x18] sm:$0xff]
    %v112 = vld [vmem:[%s3 + $0x20] sm:$0xff]
    %v113 = vld [vmem:[%s3 + $0x28] sm:$0xff]
    %vm114 = vcmask 392192
    %v116 = vsel %vm114, %v28, 0
    %v119 = vsel %vm114, %v29, 0
    %121 = vmatprep.subr.mxu0 0.0
    %122 = vmatpush1.msra.mxu0 %v108
    %123 = vmatprep.subr.mxu0 0.0
    %124 = vmatpush1.msra.mxu0 %v109
    %125 = vmatprep.subr.mxu0 0.0
    %126 = vmatpush1.msra.mxu0 %v110
    %127 = vmatprep.subr.mxu0 0.0
    %128 = vmatpush1.msra.mxu0 %v111
    %129 = vmatprep.subr.mxu0 0.0
    %130 = vmatpush1.msra.mxu0 %v112
    %131 = vmatprep.subr.mxu0 0.0
    %132 = vmatpush1.msra.mxu0 %v113
    %133 = vmatprep.subr.mxu0 0.0
    %134 = vmatpush1.msra.mxu0 0.0
    %135 = vmatprep.subr.mxu0 0.0
    %136 = vmatpush1.msra.mxu0 0.0
    %137 = vmatprep.subr.mxu0 0.0
    %138 = vmatpush1.msra.mxu0 0.0
    %139 = vmatprep.subr.mxu0 0.0
    %140 = vmatpush1.msra.mxu0 0.0
    %141 = vmatprep.subr.mxu0 0.0
    %142 = vmatpush1.msra.mxu0 0.0
    %143 = vmatprep.subr.mxu0 0.0
    %144 = vmatpush1.msra.mxu0 0.0
    %145 = vmatprep.subr.mxu0 0.0
    %146 = vmatpush1.msra.mxu0 0.0
    %147 = vmatprep.subr.mxu0 0.0
    %148 = vmatpush1.msra.mxu0 0.0
    %149 = vmatprep.subr.mxu0 0.0
    %150 = vmatpush1.msra.mxu0 0.0
    %151 = vmatprep.subr.mxu0 0.0
    %152 = vmatpush1.msra.mxu0 0.0
    %153 = vmatprep.subr.mxu0 0.0
    %154 = vmatpush1.msra.mxu0 0.0
    %155 = vmatprep.subr.mxu0 0.0
    %156 = vmatpush1.msra.mxu0 0.0
    %157 = vmatprep.subr.mxu0 0.0
    %158 = vmatpush1.msra.mxu0 0.0
    %159 = vmatprep.subr.mxu0 0.0
    %160 = vmatpush1.msra.mxu0 0.0
    %161 = vmatprep.subr.mxu0 0.0
    %162 = vmatpush1.msra.mxu0 0.0
    %163 = vmatprep.subr.mxu0 0.0
    %164 = vmatpush1.msra.mxu0 0.0
    %165 = vmatprep.subr.mxu0 0.0
    %166 = vmatpush1.msra.mxu0 0.0
    %167 = vmatprep.subr.mxu0 0.0
    %168 = vmatpush1.msra.mxu0 0.0
    %169 = vmatprep.subr.mxu0 0.0
    %170 = vmatpush1.msra.mxu0 0.0
    %171 = vmatprep.subr.mxu0 0.0
    %172 = vmatpush1.msra.mxu0 0.0
    %173 = vmatprep.subr.mxu0 0.0
    %174 = vmatpush1.msra.mxu0 0.0
    %175 = vmatprep.subr.mxu0 0.0
    %176 = vmatpush1.msra.mxu0 0.0
    %177 = vmatprep.subr.mxu0 0.0
    %178 = vmatpush1.msra.mxu0 0.0
    %179 = vmatprep.subr.mxu0 0.0
    %180 = vmatpush1.msra.mxu0 0.0
    %181 = vmatprep.subr.mxu0 0.0
    %182 = vmatpush1.msra.mxu0 0.0
    %183 = vmatprep.subr.mxu0 0.0
    %184 = vmatpush1.msra.mxu0 0.0
    %185 = vmatprep.mubr.f32.mxu0 0.0
    %186 = vmatmul.mubr.f32.gmra.mrb[0].mxu0 %v116
    %v187 = vpop.f32.mrb[0].mxu0
    %v188 = vadd.f32 0.0, %v187
    %v189 = vpop.f32.mrb[0].mxu0
    %190 = vmatprep.mubr.f32.mxu0 0.0
    %191 = vmatmul.mubr.f32.gmra.mrb[0].mxu0 %v119
    %v192 = vpop.f32.mrb[0].mxu0
    %v193 = vadd.f32 0.0, %v192
    %v194 = vpop.f32.mrb[0].mxu0
    %195 = vdwg.mxu0
    %v196 = vld [vmem:[%s4] sm:$0xff]
    %v197 = vld [vmem:[%s4 + $0x8] sm:$0xff]
    %v198 = vld [vmem:[%s4 + $0x10] sm:$0xff]
    %v199 = vld [vmem:[%s4 + $0x18] sm:$0xff]
    %v200 = vld [vmem:[%s4 + $0x20] sm:$0xff]
    %v201 = vld [vmem:[%s4 + $0x28] sm:$0xff]
    %202 = vmatprep.subr.mxu0 0.0
    %203 = vmatpush1.msra.mxu0 %v196
    %204 = vmatprep.subr.mxu0 0.0
    %205 = vmatpush1.msra.mxu0 %v197
    %206 = vmatprep.subr.mxu0 0.0
    %207 = vmatpush1.msra.mxu0 %v198
    %208 = vmatprep.subr.mxu0 0.0
    %209 = vmatpush1.msra.mxu0 %v199
    %210 = vmatprep.subr.mxu0 0.0
    %211 = vmatpush1.msra.mxu0 %v200
    %212 = vmatprep.subr.mxu0 0.0
    %213 = vmatpush1.msra.mxu0 %v201
    %214 = vmatprep.subr.mxu0 0.0
    %215 = vmatpush1.msra.mxu0 0.0
    %216 = vmatprep.subr.mxu0 0.0
    %217 = vmatpush1.msra.mxu0 0.0
    %218 = vmatprep.subr.mxu0 0.0
    %219 = vmatpush1.msra.mxu0 0.0
    %220 = vmatprep.subr.mxu0 0.0
    %221 = vmatpush1.msra.mxu0 0.0
    %222 = vmatprep.subr.mxu0 0.0
    %223 = vmatpush1.msra.mxu0 0.0
    %224 = vmatprep.subr.mxu0 0.0
    %225 = vmatpush1.msra.mxu0 0.0
    %226 = vmatprep.subr.mxu0 0.0
    %227 = vmatpush1.msra.mxu0 0.0
    %228 = vmatprep.subr.mxu0 0.0
    %229 = vmatpush1.msra.mxu0 0.0
    %230 = vmatprep.subr.mxu0 0.0
    %231 = vmatpush1.msra.mxu0 0.0
    %232 = vmatprep.subr.mxu0 0.0
    %233 = vmatpush1.msra.mxu0 0.0
    %234 = vmatprep.subr.mxu0 0.0
    %235 = vmatpush1.msra.mxu0 0.0
    %236 = vmatprep.subr.mxu0 0.0
    %237 = vmatpush1.msra.mxu0 0.0
    %238 = vmatprep.subr.mxu0 0.0
    %239 = vmatpush1.msra.mxu0 0.0
    %240 = vmatprep.subr.mxu0 0.0
    %241 = vmatpush1.msra.mxu0 0.0
    %242 = vmatprep.subr.mxu0 0.0
    %243 = vmatpush1.msra.mxu0 0.0
    %244 = vmatprep.subr.mxu0 0.0
    %245 = vmatpush1.msra.mxu0 0.0
    %246 = vmatprep.subr.mxu0 0.0
    %247 = vmatpush1.msra.mxu0 0.0
    %248 = vmatprep.subr.mxu0 0.0
    %249 = vmatpush1.msra.mxu0 0.0
    %250 = vmatprep.subr.mxu0 0.0
    %251 = vmatpush1.msra.mxu0 0.0
    %252 = vmatprep.subr.mxu0 0.0
    %253 = vmatpush1.msra.mxu0 0.0
    %254 = vmatprep.subr.mxu0 0.0
    %255 = vmatpush1.msra.mxu0 0.0
    %256 = vmatprep.subr.mxu0 0.0
    %257 = vmatpush1.msra.mxu0 0.0
    %258 = vmatprep.subr.mxu0 0.0
    %259 = vmatpush1.msra.mxu0 0.0
    %260 = vmatprep.subr.mxu0 0.0
    %261 = vmatpush1.msra.mxu0 0.0
    %262 = vmatprep.subr.mxu0 0.0
    %263 = vmatpush1.msra.mxu0 0.0
    %264 = vmatprep.subr.mxu0 0.0
    %265 = vmatpush1.msra.mxu0 0.0
    %266 = vmatprep.mubr.f32.mxu0 0.0
    %267 = vmatmul.mubr.f32.gmra.mrb[0].mxu0 %v116
    %v268 = vpop.f32.mrb[0].mxu0
    %v269 = vadd.f32 0.0, %v268
    %v270 = vpop.f32.mrb[0].mxu0
    %271 = vmatprep.mubr.f32.mxu0 0.0
    %272 = vmatmul.mubr.f32.gmra.mrb[0].mxu0 %v119
    %v273 = vpop.f32.mrb[0].mxu0
    %v274 = vadd.f32 0.0, %v273
    %v275 = vpop.f32.mrb[0].mxu0
    %276 = vdwg.mxu0
    %v278 = vsel %vm34, %v105, 0
    %v281 = vsel %vm34, %v188, 0
    %v284 = vsel %vm34, %v193, 0
    %286 = vmatprep.subr.mxu0 0.0
    %287 = vmatpush1.xpose.msra.mxu0 %v281
    %288 = vmatprep.subr.mxu0 0.0
    %289 = vmatpush1.xpose.msra.mxu0 %v284
    %290 = vmatprep.subr.mxu0 0.0
    %291 = vmatpush1.xpose.msra.mxu0 0.0
    %292 = vmatprep.subr.mxu0 0.0
    %293 = vmatpush1.xpose.msra.mxu0 0.0
    %294 = vmatprep.subr.mxu0 0.0
    %295 = vmatpush1.xpose.msra.mxu0 0.0
    %296 = vmatprep.subr.mxu0 0.0
    %297 = vmatpush1.xpose.msra.mxu0 0.0
    %298 = vmatprep.subr.mxu0 0.0
    %299 = vmatpush1.xpose.msra.mxu0 0.0
    %300 = vmatprep.subr.mxu0 0.0
    %301 = vmatpush1.xpose.msra.mxu0 0.0
    %302 = vmatprep.subr.mxu0 0.0
    %303 = vmatpush1.xpose.msra.mxu0 0.0
    %304 = vmatprep.subr.mxu0 0.0
    %305 = vmatpush1.xpose.msra.mxu0 0.0
    %306 = vmatprep.subr.mxu0 0.0
    %307 = vmatpush1.xpose.msra.mxu0 0.0
    %308 = vmatprep.subr.mxu0 0.0
    %309 = vmatpush1.xpose.msra.mxu0 0.0
    %310 = vmatprep.subr.mxu0 0.0
    %311 = vmatpush1.xpose.msra.mxu0 0.0
    %312 = vmatprep.subr.mxu0 0.0
    %313 = vmatpush1.xpose.msra.mxu0 0.0
    %314 = vmatprep.subr.mxu0 0.0
    %315 = vmatpush1.xpose.msra.mxu0 0.0
    %316 = vmatprep.subr.mxu0 0.0
    %317 = vmatpush1.xpose.msra.mxu0 0.0
    %318 = vmatprep.subr.mxu0 0.0
    %319 = vmatpush1.xpose.msra.mxu0 0.0
    %320 = vmatprep.subr.mxu0 0.0
    %321 = vmatpush1.xpose.msra.mxu0 0.0
    %322 = vmatprep.subr.mxu0 0.0
    %323 = vmatpush1.xpose.msra.mxu0 0.0
    %324 = vmatprep.subr.mxu0 0.0
    %325 = vmatpush1.xpose.msra.mxu0 0.0
    %326 = vmatprep.subr.mxu0 0.0
    %327 = vmatpush1.xpose.msra.mxu0 0.0
    %328 = vmatprep.subr.mxu0 0.0
    %329 = vmatpush1.xpose.msra.mxu0 0.0
    %330 = vmatprep.subr.mxu0 0.0
    %331 = vmatpush1.xpose.msra.mxu0 0.0
    %332 = vmatprep.subr.mxu0 0.0
    %333 = vmatpush1.xpose.msra.mxu0 0.0
    %334 = vmatprep.subr.mxu0 0.0
    %335 = vmatpush1.xpose.msra.mxu0 0.0
    %336 = vmatprep.subr.mxu0 0.0
    %337 = vmatpush1.xpose.msra.mxu0 0.0
    %338 = vmatprep.subr.mxu0 0.0
    %339 = vmatpush1.xpose.msra.mxu0 0.0
    %340 = vmatprep.subr.mxu0 0.0
    %341 = vmatpush1.xpose.msra.mxu0 0.0
    %342 = vmatprep.subr.mxu0 0.0
    %343 = vmatpush1.xpose.msra.mxu0 0.0
    %344 = vmatprep.subr.mxu0 0.0
    %345 = vmatpush1.xpose.msra.mxu0 0.0
    %346 = vmatprep.subr.mxu0 0.0
    %347 = vmatpush1.xpose.msra.mxu0 0.0
    %348 = vmatprep.subr.mxu0 0.0
    %349 = vmatpush1.xpose.msra.mxu0 0.0
    %350 = vmatprep.mubr.f32.mxu0 0.0
    %351 = vmatmul.mubr.f32.gmra.mrb[0].mxu0 %v278
    %v352 = vpop.f32.mrb[0].mxu0
    %v353 = vadd.f32 0.0, %v352
    %v354 = vpop.f32.mrb[0].mxu0
    %355 = vdwg.mxu0
    %vm356 = vcmask 130048
    %v358 = vsel %vm356, %v353, 0
    %360 = vmatprep.subr.mxu0 0.0
    %361 = vmatpush1.msra.mxu0 %v269
    %362 = vmatprep.subr.mxu0 0.0
    %363 = vmatpush1.msra.mxu0 %v274
    %364 = vmatprep.subr.mxu0 0.0
    %365 = vmatpush1.msra.mxu0 0.0
    %366 = vmatprep.subr.mxu0 0.0
    %367 = vmatpush1.msra.mxu0 0.0
    %368 = vmatprep.subr.mxu0 0.0
    %369 = vmatpush1.msra.mxu0 0.0
    %370 = vmatprep.subr.mxu0 0.0
    %371 = vmatpush1.msra.mxu0 0.0
    %372 = vmatprep.subr.mxu0 0.0
    %373 = vmatpush1.msra.mxu0 0.0
    %374 = vmatprep.subr.mxu0 0.0
    %375 = vmatpush1.msra.mxu0 0.0
    %376 = vmatprep.subr.mxu0 0.0
    %377 = vmatpush1.msra.mxu0 0.0
    %378 = vmatprep.subr.mxu0 0.0
    %379 = vmatpush1.msra.mxu0 0.0
    %380 = vmatprep.subr.mxu0 0.0
    %381 = vmatpush1.msra.mxu0 0.0
    %382 = vmatprep.subr.mxu0 0.0
    %383 = vmatpush1.msra.mxu0 0.0
    %384 = vmatprep.subr.mxu0 0.0
    %385 = vmatpush1.msra.mxu0 0.0
    %386 = vmatprep.subr.mxu0 0.0
    %387 = vmatpush1.msra.mxu0 0.0
    %388 = vmatprep.subr.mxu0 0.0
    %389 = vmatpush1.msra.mxu0 0.0
    %390 = vmatprep.subr.mxu0 0.0
    %391 = vmatpush1.msra.mxu0 0.0
    %392 = vmatprep.subr.mxu0 0.0
    %393 = vmatpush1.msra.mxu0 0.0
    %394 = vmatprep.subr.mxu0 0.0
    %395 = vmatpush1.msra.mxu0 0.0
    %396 = vmatprep.subr.mxu0 0.0
    %397 = vmatpush1.msra.mxu0 0.0
    %398 = vmatprep.subr.mxu0 0.0
    %399 = vmatpush1.msra.mxu0 0.0
    %400 = vmatprep.subr.mxu0 0.0
    %401 = vmatpush1.msra.mxu0 0.0
    %402 = vmatprep.subr.mxu0 0.0
    %403 = vmatpush1.msra.mxu0 0.0
    %404 = vmatprep.subr.mxu0 0.0
    %405 = vmatpush1.msra.mxu0 0.0
    %406 = vmatprep.subr.mxu0 0.0
    %407 = vmatpush1.msra.mxu0 0.0
    %408 = vmatprep.subr.mxu0 0.0
    %409 = vmatpush1.msra.mxu0 0.0
    %410 = vmatprep.subr.mxu0 0.0
    %411 = vmatpush1.msra.mxu0 0.0
    %412 = vmatprep.subr.mxu0 0.0
    %413 = vmatpush1.msra.mxu0 0.0
    %414 = vmatprep.subr.mxu0 0.0
    %415 = vmatpush1.msra.mxu0 0.0
    %416 = vmatprep.subr.mxu0 0.0
    %417 = vmatpush1.msra.mxu0 0.0
    %418 = vmatprep.subr.mxu0 0.0
    %419 = vmatpush1.msra.mxu0 0.0
    %420 = vmatprep.subr.mxu0 0.0
    %421 = vmatpush1.msra.mxu0 0.0
    %422 = vmatprep.subr.mxu0 0.0
    %423 = vmatpush1.msra.mxu0 0.0
    %424 = vmatprep.mubr.f32.mxu0 0.0
    %425 = vmatmul.mubr.f32.gmra.mrb[0].mxu0 %v358
    %v426 = vpop.f32.mrb[0].mxu0
    %v427 = vadd.f32 %v27, %v426
    %v428 = vpop.f32.mrb[0].mxu0
    %429 = vdwg.mxu0
    %v430 = vsel %vm34, %v427, 0.0
    %431 = vadd.xlane.f32.xlu0 %v430
    %v432 = vpop.xlane.xlu0 %431
    %v433 = vrcp.pop 32.0
    %v434 = vmul.f32 %v432, %v433
    %v435 = vmul.f32 %v427, %v427
    %v436 = vsel %vm34, %v435, 0.0
    %437 = vadd.xlane.f32.xlu0 %v436
    %v438 = vpop.xlane.xlu0 %437
    %v439 = vmul.f32 %v438, %v433
    %v440 = vmul.f32 %v434, %v434
    %v441 = vsub.f32 %v439, %v440
    %v442 = vsub.f32 %v427, %v434
    %v443 = vadd.f32 %v441, 1e-06
    %v444 = vrsqrt.pop %v443
    %v445 = vmul.f32 %v442, %v444
    %v446 = vld [vmem:[%s5] sm:$0x1]
    %v448 = vlaneseq
    %v449 = vshrl.u32 %v448, 7
    %v450 = vsub.s32 0, %v449
    %v451 = vrot.slane %v446, %v450
    %v453 = vmul.f32 %v445, %v451
    %v454 = vld [vmem:[%s6] sm:$0x1]
    %v456 = vlaneseq
    %v457 = vshrl.u32 %v456, 7
    %v458 = vsub.s32 0, %v457
    %v459 = vrot.slane %v454, %v458
    %v461 = vadd.f32 %v453, %v459
    %462 = vst.msk [vmem:[#allocation2] sm:$0xff] %vm34, %v461
    // Predicated region
    $region30: #{tpu_custom_call.1} parent=1 // pred_check
      _
    $region31: #{tpu_custom_call.1} parent=1 // pred_check_branch
      %464 = sbr.rel (0) target = $region33
    $region32: #{tpu_custom_call.1} parent=1 // pred_region
      %s466 = ssub.s32 128, 128
      %467 = vsyncadd [#allocation3], %s466
      %s469 = sshll.u32 [#allocation2], 4
      %s470 = int_to_ptr.vmem [resolvable:$true] %s469
      %472 = dma.vmem_to_hbm [thread:$0]  %s470, 128, %s7, [#allocation3]
    $region33: #{tpu_custom_call.1} parent=1 // pred_fallthru
      _
    // Predicated region
    $region34: #{tpu_custom_call.1} parent=1 // pred_check
      _
    $region35: #{tpu_custom_call.1} parent=1 // pred_check_branch
      %474 = sbr.rel (0) target = $region37
    $region36: #{tpu_custom_call.1} parent=1 // pred_region
      %475 = dma.done [#allocation3], 128
    $region37: #{tpu_custom_call.1} parent=1 // pred_fallthru
      _
    %476 = vsyncpa [#allocation3], 1

</llo_original>
